<compile_context>
chip_gen: v5e
topology: v5e:2x2
jax: 0.10.0
libtpu: 0.0.40
codegen_flags: <defaults>
</compile_context>

<pallas_src>
import functools

import jax
import jax.numpy as jnp
from jax.experimental import pallas as pl
from jax.experimental.pallas import tpu as pltpu


def _round_up(x, m):
    return (x + m - 1) // m * m


def _vmem_limit(block_bytes, scratch_bytes=0):
    """Scoped-VMEM limit derived from actual tile sizes (double-buffered
    blocks + scratch + margin), clamped to 48 MiB so it is v7x-safe."""
    need = 2 * block_bytes + scratch_bytes + (4 << 20)
    return int(min(max(need, 32 << 20), 48 << 20))


# -----------------------------------------------------------------------------
# Conv 3x3 (pad=1, stride=1) + ReLU kernel (row-tiled, NHWC)
# -----------------------------------------------------------------------------
def conv3x3_relu(x, w, b, *, cout_tile=128, rows_per_tile=32):
    """x: (N, H, W, Cin); w: (9, Cin, Cout) tap-major (t = ky*3+kx); b: (1, Cout).

    Returns (N, H, W, Cout) bf16.
    """
    N, H, W, Cin = x.shape
    Cout = w.shape[-1]

    row_p = _round_up(W + 2, 8)        # padded "wide" row length (8-aligned)
    TH = min(rows_per_tile, H)         # output rows per grid step
    nT = (H + TH - 1) // TH            # number of row tiles
    Hh = nT * TH                       # output rows incl. junk tail rows
    m = TH * row_p                     # flattened output rows per tile
    tcout = min(cout_tile, Cout)
    assert Cout % tcout == 0

    xb = x.astype(jnp.bfloat16)
    wb = w.astype(jnp.bfloat16)
    bf = b.astype(jnp.float32)

    # Zero-pad: 1 top row, (Hh - H + 2) bottom rows, 1 left col, rest right.
    xp = jnp.pad(xb, ((0, 0), (1, Hh - H + 2), (1, row_p - 1 - W), (0, 0)))

    grid = (N, nT, Cout // tcout)
    out_shape = jax.ShapeDtypeStruct((N, nT, m, Cout), jnp.bfloat16)
    out_spec = pl.BlockSpec((1, 1, m, tcout), lambda n, i, j: (n, i, 0, j))
    b_spec = pl.BlockSpec((1, tcout), lambda n, i, j: (0, j))

    if Cin <= 8:
        # ---- layer-1 path: wrapper-side im2col, one K = 9*Cin matmul -------
        K = 9 * Cin
        xf = xp.reshape(N, (Hh + 3) * row_p, Cin)
        M = Hh * row_p
        cols = [xf[:, dy * row_p + dx: dy * row_p + dx + M, :]
                for dy in range(3) for dx in range(3)]
        x_im = jnp.concatenate(cols, axis=-1).reshape(N, nT, m, K)
        w_k = wb.reshape(K, Cout)      # K index = tap*Cin + cin (matches cols)

        def kernel(x_ref, w_ref, b_ref, o_ref):
            y = jnp.dot(x_ref[0, 0], w_ref[...],
                        preferred_element_type=jnp.float32)
            o_ref[0, 0] = jnp.maximum(y + b_ref[...], 0.0).astype(o_ref.dtype)

        blk_bytes = m * K * 2 + K * tcout * 2 + tcout * 4 + m * tcout * 2
        yf = pl.pallas_call(
            kernel,
            out_shape=out_shape,
            grid=grid,
            in_specs=[
                pl.BlockSpec((1, 1, m, K), lambda n, i, j: (n, i, 0, 0)),
                pl.BlockSpec((K, tcout), lambda n, i, j: (0, j)),
                b_spec,
            ],
            out_specs=out_spec,
            compiler_params=pltpu.CompilerParams(
                dimension_semantics=("parallel", "parallel", "parallel"),
                vmem_limit_bytes=_vmem_limit(blk_bytes)),
        )(x_im, w_k, bf)
    else:
        # ---- tap path: 9 big matmuls grouped by dy (3 accumulator passes) ---
        # Row-tile i needs padded rows [i*TH, i*TH + TH + 3); gather the
        # overlapping halo windows wrapper-side (fuses with the pad copy,
        # ~3/TH duplication).
        xw = jnp.stack([xp[:, i * TH: i * TH + TH + 3] for i in range(nT)],
                       axis=1)
        xw = xw.reshape(N, nT, (TH + 3) * row_p, Cin)

        def kernel(x_ref, w_ref, b_ref, o_ref, acc_ref):
            # x_ref: (1, 1, (TH+3)*row_p, Cin) bf16 windowed padded input
            # w_ref: (9, Cin, tcout) bf16 ; b_ref: (1, tcout) f32
            # o_ref: (1, 1, m, tcout) bf16 ; acc_ref: (m, tcout) f32 scratch
            for dy in range(3):
                base = dy * row_p       # multiple of 8 -> aligned static slice
                c = (jnp.dot(x_ref[0, 0, base:base + m, :],
                             w_ref[3 * dy],
                             preferred_element_type=jnp.float32)
                     + jnp.dot(x_ref[0, 0, base + 1:base + 1 + m, :],
                               w_ref[3 * dy + 1],
                               preferred_element_type=jnp.float32)
                     + jnp.dot(x_ref[0, 0, base + 2:base + 2 + m, :],
                               w_ref[3 * dy + 2],
                               preferred_element_type=jnp.float32))
                if dy == 0:
                    acc_ref[...] = c
                else:
                    acc_ref[...] += c
            y = jnp.maximum(acc_ref[...] + b_ref[...], 0.0)
            o_ref[0, 0] = y.astype(o_ref.dtype)

        blk_bytes = ((TH + 3) * row_p * Cin * 2 + 9 * Cin * tcout * 2
                     + tcout * 4 + m * tcout * 2)
        acc_bytes = m * tcout * 4
        yf = pl.pallas_call(
            kernel,
            out_shape=out_shape,
            grid=grid,
            in_specs=[
                pl.BlockSpec((1, 1, (TH + 3) * row_p, Cin),
                             lambda n, i, j: (n, i, 0, 0)),
                pl.BlockSpec((9, Cin, tcout), lambda n, i, j: (0, 0, j)),
                b_spec,
            ],
            out_specs=out_spec,
            scratch_shapes=[pltpu.VMEM((m, tcout), jnp.float32)],
            compiler_params=pltpu.CompilerParams(
                dimension_semantics=("parallel", "parallel", "parallel"),
                vmem_limit_bytes=_vmem_limit(blk_bytes, acc_bytes)),
        )(xw, wb, bf)

    # Drop junk wide columns / junk tail rows; this slice fuses with the next
    # layer's pad/window copy under jit.
    return yf.reshape(N, Hh, row_p, Cout)[:, :H, :W, :]


# -----------------------------------------------------------------------------
# MaxPool 2x2 (stride 2) kernel (row-tiled, NHWC)
# -----------------------------------------------------------------------------
def maxpool2x2(x, *, rows_per_tile=64):
    N, H, W, C = x.shape
    Hout, Wout = H // 2, W // 2
    thp = min(rows_per_tile, Hout)
    while Hout % thp:
        thp -= 1
    # Free bitcast: pair H rows and interleave the W pair into the lane dim.
    xr = x.reshape(N, Hout, 2, Wout, 2 * C)

    def kernel(x_ref, o_ref):
        # x_ref: (1, thp, 2, Wout, 2*C) ; o_ref: (1, thp, Wout, C)
        a = x_ref[0, :, 0]                 # even input rows
        b = x_ref[0, :, 1]                 # odd input rows
        r = jnp.maximum(a, b)
        o_ref[0] = jnp.maximum(r[..., :C], r[..., C:])

    blk_bytes = (thp * 2 * Wout * 2 * C + thp * Wout * C) * x.dtype.itemsize
    return pl.pallas_call(
        kernel,
        out_shape=jax.ShapeDtypeStruct((N, Hout, Wout, C), x.dtype),
        grid=(N, Hout // thp),
        in_specs=[pl.BlockSpec((1, thp, 2, Wout, 2 * C),
                               lambda n, i: (n, i, 0, 0, 0))],
        out_specs=pl.BlockSpec((1, thp, Wout, C), lambda n, i: (n, i, 0, 0)),
        compiler_params=pltpu.CompilerParams(
            dimension_semantics=("parallel", "parallel"),
            vmem_limit_bytes=_vmem_limit(blk_bytes)),
    )(xr)


# -----------------------------------------------------------------------------
# VGG19 `features` conv stack used by VGGEncoder:
#   slice1: conv(3,64)+ReLU
#   slice2: conv(64,64)+ReLU, maxpool, conv(64,128)+ReLU
#   slice3: conv(128,128)+ReLU, maxpool, conv(128,256)+ReLU
#   slice4: conv(256,256)+ReLU x3, maxpool, conv(256,512)+ReLU
# -----------------------------------------------------------------------------
_CONV_CHANNELS = [
    (3, 64),                                           # slice1
    (64, 64), (64, 128),                               # slice2 (pool between)
    (128, 128), (128, 256),                            # slice3 (pool between)
    (256, 256), (256, 256), (256, 256), (256, 512),    # slice4 (pool before last)
]


def init_vgg_encoder_params(key):
    """Deterministic synthetic weights; shapes match vgg19.features convs.

    PyTorch layout would be (cout, cin, 3, 3); kernel layout here is
    (9, cin, cout) with tap index t = ky*3 + kx, i.e.
    w_pallas[ky*3+kx, cin, cout] = w_torch[cout, cin, ky, kx].
    """
    params = []
    for i, (cin, cout) in enumerate(_CONV_CHANNELS):
        kw, kb = jax.random.split(jax.random.fold_in(key, i))
        w = jax.random.normal(kw, (3, 3, cin, cout), jnp.float32) * (0.1 / (cin ** 0.5))
        b = jax.random.normal(kb, (cout,), jnp.float32) * 0.01
        params.append((w.reshape(9, cin, cout), b.reshape(1, cout)))
    return params


def vgg_encoder_forward(params, images_nchw, output_last_feature=False):
    # images_nchw: (N, 3, H, W), same axis convention as the PyTorch module.
    x = jnp.transpose(images_nchw, (0, 2, 3, 1))  # NCHW -> NHWC
    p = iter(params)

    h1 = conv3x3_relu(x, *next(p))        # slice1: conv+relu

    h2 = conv3x3_relu(h1, *next(p))       # slice2: conv+relu
    h2 = maxpool2x2(h2)                   #          maxpool
    h2 = conv3x3_relu(h2, *next(p))       #          conv+relu

    h3 = conv3x3_relu(h2, *next(p))       # slice3: conv+relu
    h3 = maxpool2x2(h3)                   #          maxpool
    h3 = conv3x3_relu(h3, *next(p))       #          conv+relu

    h4 = conv3x3_relu(h3, *next(p))       # slice4: conv+relu x3
    h4 = conv3x3_relu(h4, *next(p))
    h4 = conv3x3_relu(h4, *next(p))
    h4 = maxpool2x2(h4)                   #          maxpool
    h4 = conv3x3_relu(h4, *next(p))       #          conv+relu

    def to_nchw_f32(t):
        return jnp.transpose(t.astype(jnp.float32), (0, 3, 1, 2))

    if output_last_feature:
        return to_nchw_f32(h4)
    return tuple(to_nchw_f32(t) for t in (h1, h2, h3, h4))


# -----------------------------------------------------------------------------
# Pure-JAX references (bf16-matched inputs) for single-layer sanity checks
# -----------------------------------------------------------------------------
def _conv_ref(x, w9, b):
    xb = x.astype(jnp.bfloat16).astype(jnp.float32)
    wb = w9.astype(jnp.bfloat16).astype(jnp.float32)
    N, H, W, Cin = x.shape
    Cout = w9.shape[-1]
    xp = jnp.pad(xb, ((0, 0), (1, 1), (1, 1), (0, 0)))
    out = jnp.zeros((N, H, W, Cout), jnp.float32)
    for t in range(9):
        dy, dx = divmod(t, 3)
        out = out + jnp.einsum('nhwc,cd->nhwd',
                               xp[:, dy:dy + H, dx:dx + W, :], wb[t])
    return jnp.maximum(out + b.reshape(1, 1, 1, -1), 0.0)


def _pool_ref(x):
    N, H, W, C = x.shape
    return jnp.max(x.astype(jnp.float32).reshape(N, H // 2, 2, W // 2, 2, C),
                   axis=(2, 4))


if __name__ == "__main__":
    key = jax.random.PRNGKey(0)
    pkey, xkey = jax.random.split(key)
    params = init_vgg_encoder_params(pkey)

    # Small input consistent with the module: NCHW, 3 input channels.
    images = jax.random.normal(xkey, (2, 3, 16, 16), jnp.float32)
    x_nhwc = jnp.transpose(images, (0, 2, 3, 1))

    conv_fn = jax.jit(lambda a, ww, bb: conv3x3_relu(a, ww, bb))
    pool_fn = jax.jit(maxpool2x2)

    # Single-layer sanity checks against pure-JAX references.
    w0, b0 = params[0]
    h1 = conv_fn(x_nhwc, w0, b0)                       # im2col path (Cin=3)
    assert bool(jnp.allclose(h1.astype(jnp.float32), _conv_ref(x_nhwc, w0, b0),
                             atol=3e-2, rtol=3e-2))
    w1, b1 = params[1]
    y2 = conv_fn(h1, w1, b1)                           # tap path (Cin=64)
    assert bool(jnp.allclose(y2.astype(jnp.float32),
                             _conv_ref(h1.astype(jnp.float32), w1, b1),
                             atol=3e-2, rtol=3e-2))
    p2 = pool_fn(y2)
    assert bool(jnp.allclose(p2.astype(jnp.float32), _pool_ref(y2),
                             atol=1e-6))

    # Full forward pass.
    fwd = jax.jit(functools.partial(vgg_encoder_forward,
                                    output_last_feature=False))
    f1, f2, f3, f4 = fwd(params, images)
    jax.block_until_ready((f1, f2, f3, f4))

    assert f1.shape == (2, 64, 16, 16)
    assert f2.shape == (2, 128, 8, 8)
    assert f3.shape == (2, 256, 4, 4)
    assert f4.shape == (2, 512, 2, 2)
    assert all(t.dtype == jnp.float32 for t in (f1, f2, f3, f4))
    assert bool(jnp.isfinite(f4).all())

    print("KERNEL_OK")
</pallas_src>

<mosaic_0001>
module attributes {stable_mosaic.version = 11 : i64} {
  func.func @kernel(%arg0: i32, %arg1: i32, %arg2: i32, %arg3: memref<1x1x384x27xbf16, #tpu.memory_space<vmem>>, %arg4: memref<27x64xbf16, #tpu.memory_space<vmem>>, %arg5: memref<1x64xf32, #tpu.memory_space<vmem>>, %arg6: memref<1x1x384x64xbf16, #tpu.memory_space<vmem>>) attributes {dimension_semantics = [#tpu.dimension_semantics<parallel>, #tpu.dimension_semantics<parallel>, #tpu.dimension_semantics<parallel>], iteration_bounds = array<i64: 2, 1, 1>, scalar_prefetch = 0 : i64, scratch_operands = 0 : i64, tpu.core_type = #tpu.core_type<tc>, window_params = [{transform_indices = @transform_0, window_bounds = array<i64: 1, 1, 384, 27>}, {transform_indices = @transform_1, window_bounds = array<i64: 27, 64>}, {transform_indices = @transform_2, window_bounds = array<i64: 1, 64>}, {transform_indices = @transform_3, window_bounds = array<i64: 1, 1, 384, 64>}]} {
    %c0 = arith.constant 0 : index
    %c0_0 = arith.constant 0 : index
    %c0_1 = arith.constant 0 : index
    %c0_2 = arith.constant 0 : index
    %0 = vector.load %arg3[%c0, %c0_0, %c0_1, %c0_2] : memref<1x1x384x27xbf16, #tpu.memory_space<vmem>>, vector<1x1x384x27xbf16>
    %1 = vector.shape_cast %0 : vector<1x1x384x27xbf16> to vector<384x27xbf16>
    %c0_3 = arith.constant 0 : index
    %c0_4 = arith.constant 0 : index
    %2 = vector.load %arg4[%c0_3, %c0_4] : memref<27x64xbf16, #tpu.memory_space<vmem>>, vector<27x64xbf16>
    %cst = arith.constant dense<0.000000e+00> : vector<384x64xf32>
    %3 = tpu.matmul %1, %2, %cst {dimension_numbers = #tpu.dot_dimension_numbers<[1], [0], [0], [1], [0, 0, 1, 1], [], []>} : vector<384x27xbf16>, vector<27x64xbf16>, vector<384x64xf32> -> vector<384x64xf32>
    %c0_5 = arith.constant 0 : index
    %c0_6 = arith.constant 0 : index
    %4 = vector.load %arg5[%c0_5, %c0_6] : memref<1x64xf32, #tpu.memory_space<vmem>>, vector<1x64xf32>
    %5 = vector.broadcast %4 : vector<1x64xf32> to vector<384x64xf32>
    %6 = arith.addf %3, %5 : vector<384x64xf32>
    %cst_7 = arith.constant 0.000000e+00 : f32
    %7 = vector.broadcast %cst_7 : f32 to vector<384x64xf32>
    %8 = arith.maximumf %6, %7 : vector<384x64xf32>
    %9 = arith.truncf %8 : vector<384x64xf32> to vector<384x64xbf16>
    %c0_8 = arith.constant 0 : index
    %c0_9 = arith.constant 0 : index
    %c0_10 = arith.constant 0 : index
    %c0_11 = arith.constant 0 : index
    %10 = vector.load %arg6[%c0_8, %c0_9, %c0_10, %c0_11] : memref<1x1x384x64xbf16, #tpu.memory_space<vmem>>, vector<1x1x384x64xbf16>
    %11 = vector.shape_cast %10 : vector<1x1x384x64xbf16> to vector<384x64xbf16>
    %12 = vector.shape_cast %9 : vector<384x64xbf16> to vector<1x1x384x64xbf16>
    tpu.vector_store %arg6[%c0_8, %c0_9, %c0_10, %c0_11], %12 {strides = array<i32>} : memref<1x1x384x64xbf16, #tpu.memory_space<vmem>>, vector<1x1x384x64xbf16>,
    return
  }
  func.func @transform_0(%arg0: i32, %arg1: i32, %arg2: i32) -> (i32, i32, i32, i32) {
    %c0_i32 = arith.constant 0 : i32
    %c0_i32_0 = arith.constant 0 : i32
    %c0_i32_1 = arith.constant 0 : i32
    return %arg0, %arg1, %c0_i32, %c0_i32_0 : i32, i32, i32, i32
  }
  func.func @transform_1(%arg0: i32, %arg1: i32, %arg2: i32) -> (i32, i32) {
    %c0_i32 = arith.constant 0 : i32
    %c0_i32_0 = arith.constant 0 : i32
    return %c0_i32, %arg2 : i32, i32
  }
  func.func @transform_2(%arg0: i32, %arg1: i32, %arg2: i32) -> (i32, i32) {
    %c0_i32 = arith.constant 0 : i32
    %c0_i32_0 = arith.constant 0 : i32
    return %c0_i32, %arg2 : i32, i32
  }
  func.func @transform_3(%arg0: i32, %arg1: i32, %arg2: i32) -> (i32, i32, i32, i32) {
    %c0_i32 = arith.constant 0 : i32
    %c0_i32_0 = arith.constant 0 : i32
    return %arg0, %arg1, %c0_i32, %arg2 : i32, i32, i32, i32
  }
}

</mosaic_0001>

<llo_original>
// kernel: _lambda_.1
$region0: #{_lambda_.1}
  #allocation0 [shape = 'u32[]', space=smem, size = 0x4, offset = 0x4, fixed_abs, tag = 'smem constant byte address 0x4 - core index']
  #allocation1 [shape = 'u32[72,128]{1,0:T(1,128)}', space=vmem, size = 0x9000, scoped, tag = 'internal scratch']
  %s0 = inlined_call_operand.vmem [shape: bf16[2,1,384,27], index: 0, kind: input, shape index: {}]
  %s1 = inlined_call_operand.vmem [shape: bf16[27,64], index: 1, kind: input, shape index: {}]
  %s2 = inlined_call_operand.vmem [shape: f32[1,64], index: 2, kind: input, shape index: {}]
  %s3 = inlined_call_operand.vmem [shape: bf16[2,1,384,64], index: 3, kind: output, shape index: {}]
  %s4 = sld [smem:[#allocation0]]
  $region45: #{_lambda_.1} parent=0
    _
  %s6 = ssub.s32 1, %s4
  %s7 = scalar_select 0, %s6, %s4
  loop: start=0, step=1, limit=4
  $region2: #{_lambda_.1} parent=0 // loop_pre_header
    _
  $region3: #{_lambda_.1} parent=0 // loop_header
    %s9 = sphi 0, %s13
    %p10 = scmp.ge.s32.totalorder %s9, 4
    %s16 = sphi 0, %s35
    %s17 = sphi 0, %s31
    %s18 = sphi 0, %s27
    %s19 = sphi 0, %s16
    %s20 = sphi 0, %s17
    %s21 = sphi 0, %s18
    %s22 = sphi 0, %s19
    %s23 = sphi 0, %s20
    %s24 = sphi 0, %s21
    %s40 = sphi 0, %s42
    %s43 = sphi 0, %s40
    %s44 = sphi 0, %s43
    %s60 = sphi 0, %s44
    %s66 = sphi 0, %s68
    %s69 = sphi 0, %s66
    %s70 = sphi 0, %s69
    %s86 = sphi 0, %s70
    %s92 = sphi 0, %s94
    %s95 = sphi 0, %s92
    %s96 = sphi 0, %s95
    %s112 = sphi 0, %s96
    %s122 = sphi 0, %s124
    %s125 = sphi 0, %s122
    %s126 = sphi 0, %s125
    %s142 = sphi 0, %s126
  $region4: #{_lambda_.1} parent=0 // loop_header_branch
    %12 = sbr.rel (%p10) target = $region8
  $region5: #{_lambda_.1} parent=0 // loop_body
    %s14 = ssub.s32 %s9, 1
    %s15 = ssub.s32 %s9, 2
    %s25 = sadd.s32 1, %s18
    %p26 = scmp.ge.s32.totalorder %s25, 1
    %s27 = scalar_select %p26, 0, %s25
    %s28 = sadd.s32 1, %s17
    %s29 = scalar_select %p26, %s28, %s17
    %p30 = scmp.ge.s32.totalorder %s29, 1
    %s31 = scalar_select %p30, 0, %s29
    %s32 = sadd.s32 1, %s16
    %s33 = scalar_select %p30, %s32, %s16
    %p34 = scmp.ge.s32.totalorder %s33, 2
    %s35 = scalar_select %p34, 0, %s33
    %s36 = ssub.s32 %s16, %s35
    %s37 = ssub.s32 %s17, %s31
    %s38 = sor.u32 %s36, %s37
    %p39 = scmp.eq.s32.totalorder %s38, 0
    %s41 = sadd.s32 %s40, 1
    %s42 = scalar_select %p39, %s40, %s41
    %p45 = pneg %p39
    %p46 = scmp.eq.s32.totalorder %s9, 1
    %p47 = por %p45, %p46
    %p48 = scmp.ne.s32.totalorder %s40, %s43
    %p49 = scmp.eq.s32.totalorder %s9, 0
    %p50 = por %p48, %p49
    %p51 = scmp.ne.s32.totalorder %s40, %s43
    %p52 = scmp.eq.s32.totalorder %s14, 1
    %p53 = por %p51, %p52
    %p54 = scmp.ne.s32.totalorder %s43, %s44
    %p55 = scmp.eq.s32.totalorder %s14, 0
    %p56 = por %p54, %p55
    %p57 = scmp.ne.s32.totalorder %s43, %s44
    %p58 = scmp.eq.s32.totalorder %s15, 1
    %p59 = por %p57, %p58
    %p61 = scmp.ne.s32.totalorder %s44, %s60
    %p62 = scmp.eq.s32.totalorder %s15, 0
    %p63 = por %p61, %p62
    %s64 = ssub.s32 %s18, %s27
    %p65 = scmp.eq.s32.totalorder %s64, 0
    %s67 = sadd.s32 %s66, 1
    %s68 = scalar_select %p65, %s66, %s67
    %p71 = pneg %p65
    %p72 = scmp.eq.s32.totalorder %s9, 1
    %p73 = por %p71, %p72
    %p74 = scmp.ne.s32.totalorder %s66, %s69
    %p75 = scmp.eq.s32.totalorder %s9, 0
    %p76 = por %p74, %p75
    %p77 = scmp.ne.s32.totalorder %s66, %s69
    %p78 = scmp.eq.s32.totalorder %s14, 1
    %p79 = por %p77, %p78
    %p80 = scmp.ne.s32.totalorder %s69, %s70
    %p81 = scmp.eq.s32.totalorder %s14, 0
    %p82 = por %p80, %p81
    %p83 = scmp.ne.s32.totalorder %s69, %s70
    %p84 = scmp.eq.s32.totalorder %s15, 1
    %p85 = por %p83, %p84
    %p87 = scmp.ne.s32.totalorder %s70, %s86
    %p88 = scmp.eq.s32.totalorder %s15, 0
    %p89 = por %p87, %p88
    %s90 = ssub.s32 %s18, %s27
    %p91 = scmp.eq.s32.totalorder %s90, 0
    %s93 = sadd.s32 %s92, 1
    %s94 = scalar_select %p91, %s92, %s93
    %p97 = pneg %p91
    %p98 = scmp.eq.s32.totalorder %s9, 1
    %p99 = por %p97, %p98
    %p100 = scmp.ne.s32.totalorder %s92, %s95
    %p101 = scmp.eq.s32.totalorder %s9, 0
    %p102 = por %p100, %p101
    %p103 = scmp.ne.s32.totalorder %s92, %s95
    %p104 = scmp.eq.s32.totalorder %s14, 1
    %p105 = por %p103, %p104
    %p106 = scmp.ne.s32.totalorder %s95, %s96
    %p107 = scmp.eq.s32.totalorder %s14, 0
    %p108 = por %p106, %p107
    %p109 = scmp.ne.s32.totalorder %s95, %s96
    %p110 = scmp.eq.s32.totalorder %s15, 1
    %p111 = por %p109, %p110
    %p113 = scmp.ne.s32.totalorder %s96, %s112
    %p114 = scmp.eq.s32.totalorder %s15, 0
    %p115 = por %p113, %p114
    %s116 = ssub.s32 %s16, %s35
    %s117 = ssub.s32 %s17, %s31
    %s118 = sor.u32 %s116, %s117
    %s119 = ssub.s32 %s18, %s27
    %s120 = sor.u32 %s118, %s119
    %p121 = scmp.eq.s32.totalorder %s120, 0
    %s123 = sadd.s32 %s122, 1
    %s124 = scalar_select %p121, %s122, %s123
    %p127 = pneg %p121
    %p128 = scmp.eq.s32.totalorder %s9, 1
    %p129 = por %p127, %p128
    %p130 = scmp.ne.s32.totalorder %s122, %s125
    %p131 = scmp.eq.s32.totalorder %s9, 0
    %p132 = por %p130, %p131
    %p133 = scmp.ne.s32.totalorder %s122, %s125
    %p134 = scmp.eq.s32.totalorder %s14, 1
    %p135 = por %p133, %p134
    %p136 = scmp.ne.s32.totalorder %s125, %s126
    %p137 = scmp.eq.s32.totalorder %s14, 0
    %p138 = por %p136, %p137
    %p139 = scmp.ne.s32.totalorder %s125, %s126
    %p140 = scmp.eq.s32.totalorder %s15, 1
    %p141 = por %p139, %p140
    %p143 = scmp.ne.s32.totalorder %s126, %s142
    %p144 = scmp.eq.s32.totalorder %s15, 0
    %p145 = por %p143, %p144
    %p146 = scmp.le.s32.totalorder 1, %s9
    %p147 = scmp.lt.s32.totalorder %s9, 3
    %p148 = pnand %p146, %p147
    %p149 = pneg %p148
    // Predicated region
    $region9: #{_lambda_.1} parent=5 // pred_check
      _
    $region10: #{_lambda_.1} parent=5 // pred_check_branch
      %151 = sbr.rel (%p148) target = $region12
    $region11: #{_lambda_.1} parent=5 // pred_region
      %s152 = ssub.s32 %s9, 1
      // Predicated region
      $region13: #{_lambda_.1} parent=11 // pred_check
        %p153 = pneg %p82
      $region14: #{_lambda_.1} parent=11 // pred_check_branch
        %155 = sbr.rel (%p153) target = $region16
      $region15: #{_lambda_.1} parent=11 // pred_region
        %p156 = scmp.lt.s32.totalorder %s21, 0
        %s157 = scalar_select %p156, %s21, 0
        %s158 = smul.addr %s157, 4
        %s159 = scalar_lea.vmem %s1, %s158
      $region16: #{_lambda_.1} parent=11 // pred_fallthru
        _
      // Predicated region
      $region17: #{_lambda_.1} parent=11 // pred_check
        %p160 = pneg %p108
      $region18: #{_lambda_.1} parent=11 // pred_check_branch
        %162 = sbr.rel (%p160) target = $region20
      $region19: #{_lambda_.1} parent=11 // pred_region
        %p163 = scmp.lt.s32.totalorder %s21, 0
        %s164 = scalar_select %p163, %s21, 0
        %s165 = scalar_lea.vmem %s2, %s164
      $region20: #{_lambda_.1} parent=11 // pred_fallthru
        _
    $region12: #{_lambda_.1} parent=5 // pred_fallthru
      _
    %p166 = scmp.lt.s32.totalorder %s9, 2
    // Predicated region
    $region21: #{_lambda_.1} parent=5 // pred_check
      %p167 = pneg %p166
    $region22: #{_lambda_.1} parent=5 // pred_check_branch
      %169 = sbr.rel (%p167) target = $region24
    $region23: #{_lambda_.1} parent=5 // pred_region
      // Predicated region
      $region25: #{_lambda_.1} parent=23 // pred_check
        %p170 = pneg %p50
      $region26: #{_lambda_.1} parent=23 // pred_check_branch
        %172 = sbr.rel (%p170) target = $region28
      $region27: #{_lambda_.1} parent=23 // pred_region
        %p173 = scmp.lt.s32.totalorder %s16, 1
        %s174 = scalar_select %p173, %s16, 1
        %p175 = scmp.lt.s32.totalorder %s17, 0
        %s176 = scalar_select %p175, %s17, 0
        %s177 = smul.addr %s176, 48
        %s178 = smul.addr %s174, 48
        %s179 = sadd.s32 %s177, %s178
        %s180 = smul.addr %s179, 4
        %s181 = scalar_lea.vmem %s0, %s180
      $region28: #{_lambda_.1} parent=23 // pred_fallthru
        _
    $region24: #{_lambda_.1} parent=5 // pred_fallthru
      _
    %p182 = scmp.le.s32.totalorder 1, %s9
    %p183 = scmp.lt.s32.totalorder %s9, 3
    %p184 = pnand %p182, %p183
    %p185 = pneg %p184
    // Predicated region
    $region29: #{_lambda_.1} parent=5 // pred_check
      _
    $region30: #{_lambda_.1} parent=5 // pred_check_branch
      %187 = sbr.rel (%p184) target = $region32
    $region31: #{_lambda_.1} parent=5 // pred_region
      %s188 = ssub.s32 %s9, 1
      %p189 = scmp.lt.s32.totalorder %s19, 1
      %s190 = scalar_select %p189, %s19, 1
      %p191 = scmp.lt.s32.totalorder %s20, 0
      %s192 = scalar_select %p191, %s20, 0
      %s193 = smul.addr %s192, 48
      %s194 = smul.addr %s190, 48
      %s195 = sadd.s32 %s193, %s194
      %s196 = smul.addr %s195, 4
      %s197 = scalar_lea.vmem %s0, %s196
      %p198 = pneg %p56
      %p199 = pneg %p53
      %p200 = scmp.lt.s32.totalorder %s21, 0
      %s201 = scalar_select %p200, %s21, 0
      %s202 = smul.addr %s201, 4
      %s203 = scalar_lea.vmem %s1, %s202
      %p204 = pneg %p82
      %p205 = pneg %p79
      %p206 = scmp.lt.s32.totalorder %s21, 0
      %s207 = scalar_select %p206, %s21, 0
      %s208 = scalar_lea.vmem %s2, %s207
      %p209 = pneg %p108
      %p210 = pneg %p105
      %p211 = pneg %p138
      %p212 = pneg %p135
      %p213 = scmp.lt.s32.totalorder %s19, 1
      %s214 = scalar_select %p213, %s19, 1
      %p215 = scmp.lt.s32.totalorder %s20, 0
      %s216 = scalar_select %p215, %s20, 0
      %p217 = scmp.lt.s32.totalorder %s21, 0
      %s218 = scalar_select %p217, %s21, 0
      %s219 = smul.addr %s216, 48
      %s220 = sadd.s32 %s218, %s219
      %s221 = smul.addr %s214, 48
      %s222 = sadd.s32 %s220, %s221
      %s223 = smul.addr %s222, 4
      %s224 = scalar_lea.vmem %s3, %s223
      %p225 = scmp.lt.s32.totalorder %s19, 1
      %s226 = scalar_select %p225, %s19, 1
      %p227 = scmp.lt.s32.totalorder %s20, 0
      %s228 = scalar_select %p227, %s20, 0
      %s229 = smul.addr %s228, 48
      %s230 = smul.addr %s226, 48
      %s231 = sadd.s32 %s229, %s230
      %s232 = smul.addr %s231, 4
      %s233 = scalar_lea.vmem %s0, %s232
      %p234 = scmp.lt.s32.totalorder %s21, 0
      %s235 = scalar_select %p234, %s21, 0
      %s236 = smul.addr %s235, 4
      %s237 = scalar_lea.vmem %s1, %s236
      %p238 = scmp.lt.s32.totalorder %s21, 0
      %s239 = scalar_select %p238, %s21, 0
      %s240 = scalar_lea.vmem %s2, %s239
      %p241 = scmp.lt.s32.totalorder %s19, 1
      %s242 = scalar_select %p241, %s19, 1
      %p243 = scmp.lt.s32.totalorder %s20, 0
      %s244 = scalar_select %p243, %s20, 0
      %p245 = scmp.lt.s32.totalorder %s21, 0
      %s246 = scalar_select %p245, %s21, 0
      %s247 = smul.addr %s244, 48
      %s248 = sadd.s32 %s246, %s247
      %s249 = smul.addr %s242, 48
      %s250 = sadd.s32 %s248, %s249
      %s251 = smul.addr %s250, 4
      %s252 = scalar_lea.vmem %s3, %s251
      %v254 = vld [vmem:[%s233] sm:$0xf]
      %v255 = vld [vmem:[%s233 + $0x4] sm:$0xf]
      %v256 = vld [vmem:[%s233 + $0x8] sm:$0xf]
      %v257 = vld [vmem:[%s233 + $0xc] sm:$0xf]
      %v258 = vld [vmem:[%s233 + $0x10] sm:$0xf]
      %v259 = vld [vmem:[%s233 + $0x14] sm:$0xf]
      %v260 = vld [vmem:[%s233 + $0x18] sm:$0xf]
      %v261 = vld [vmem:[%s233 + $0x1c] sm:$0xf]
      %v262 = vld [vmem:[%s233 + $0x20] sm:$0xf]
      %v263 = vld [vmem:[%s233 + $0x24] sm:$0xf]
      %v264 = vld [vmem:[%s233 + $0x28] sm:$0xf]
      %v265 = vld [vmem:[%s233 + $0x2c] sm:$0xf]
      %v266 = vld [vmem:[%s233 + $0x30] sm:$0xf]
      %v267 = vld [vmem:[%s233 + $0x34] sm:$0xf]
      %v268 = vld [vmem:[%s233 + $0x38] sm:$0xf]
      %v269 = vld [vmem:[%s233 + $0x3c] sm:$0xf]
      %v270 = vld [vmem:[%s233 + $0x40] sm:$0xf]
      %v271 = vld [vmem:[%s233 + $0x44] sm:$0xf]
      %v272 = vld [vmem:[%s233 + $0x48] sm:$0xf]
      %v273 = vld [vmem:[%s233 + $0x4c] sm:$0xf]
      %v274 = vld [vmem:[%s233 + $0x50] sm:$0xf]
      %v275 = vld [vmem:[%s233 + $0x54] sm:$0xf]
      %v276 = vld [vmem:[%s233 + $0x58] sm:$0xf]
      %v277 = vld [vmem:[%s233 + $0x5c] sm:$0xf]
      %v278 = vld [vmem:[%s233 + $0x60] sm:$0xf]
      %v279 = vld [vmem:[%s233 + $0x64] sm:$0xf]
      %v280 = vld [vmem:[%s233 + $0x68] sm:$0xf]
      %v281 = vld [vmem:[%s233 + $0x6c] sm:$0xf]
      %v282 = vld [vmem:[%s233 + $0x70] sm:$0xf]
      %v283 = vld [vmem:[%s233 + $0x74] sm:$0xf]
      %v284 = vld [vmem:[%s233 + $0x78] sm:$0xf]
      %v285 = vld [vmem:[%s233 + $0x7c] sm:$0xf]
      %v286 = vld [vmem:[%s233 + $0x80] sm:$0xf]
      %v287 = vld [vmem:[%s233 + $0x84] sm:$0xf]
      %v288 = vld [vmem:[%s233 + $0x88] sm:$0xf]
      %v289 = vld [vmem:[%s233 + $0x8c] sm:$0xf]
      %v290 = vld [vmem:[%s233 + $0x90] sm:$0xf]
      %v291 = vld [vmem:[%s233 + $0x94] sm:$0xf]
      %v292 = vld [vmem:[%s233 + $0x98] sm:$0xf]
      %v293 = vld [vmem:[%s233 + $0x9c] sm:$0xf]
      %v294 = vld [vmem:[%s233 + $0xa0] sm:$0xf]
      %v295 = vld [vmem:[%s233 + $0xa4] sm:$0xf]
      %v296 = vld [vmem:[%s233 + $0xa8] sm:$0xf]
      %v297 = vld [vmem:[%s233 + $0xac] sm:$0xf]
      %v298 = vld [vmem:[%s233 + $0xb0] sm:$0xf]
      %v299 = vld [vmem:[%s233 + $0xb4] sm:$0xf]
      %v300 = vld [vmem:[%s233 + $0xb8] sm:$0xf]
      %v301 = vld [vmem:[%s233 + $0xbc] sm:$0xf]
      %v302 = vld [vmem:[%s237] sm:$0xf]
      %v303 = vld [vmem:[%s237 + $0x4] sm:$0xf]
      %v304 = vld [vmem:[%s237 + $0x8] sm:$0xf]
      %v305 = vld [vmem:[%s237 + $0xc] sm:$0x3]
      %v306 = vld [vmem:[%s240] sm:$0x1]
      %v308 = vperm.slane %v306, 0
      %v358 = vunpack.c.l.b16 %v254
      %v359 = vunpack.c.l.b16 %v255
      %v360 = vunpack.c.l.b16 %v256
      %v361 = vunpack.c.l.b16 %v257
      %v362 = vunpack.c.l.b16 %v258
      %v363 = vunpack.c.l.b16 %v259
      %v364 = vunpack.c.l.b16 %v260
      %v365 = vunpack.c.l.b16 %v261
      %v366 = vunpack.c.l.b16 %v262
      %v367 = vunpack.c.l.b16 %v263
      %v368 = vunpack.c.l.b16 %v264
      %v369 = vunpack.c.l.b16 %v265
      %v370 = vunpack.c.l.b16 %v266
      %v371 = vunpack.c.l.b16 %v267
      %v372 = vunpack.c.l.b16 %v268
      %v373 = vunpack.c.l.b16 %v269
      %v374 = vunpack.c.l.b16 %v270
      %v375 = vunpack.c.l.b16 %v271
      %v376 = vunpack.c.l.b16 %v272
      %v377 = vunpack.c.l.b16 %v273
      %v378 = vunpack.c.l.b16 %v274
      %v379 = vunpack.c.l.b16 %v275
      %v380 = vunpack.c.l.b16 %v276
      %v381 = vunpack.c.l.b16 %v277
      %v382 = vunpack.c.l.b16 %v278
      %v383 = vunpack.c.l.b16 %v279
      %v384 = vunpack.c.l.b16 %v280
      %v385 = vunpack.c.l.b16 %v281
      %v386 = vunpack.c.l.b16 %v282
      %v387 = vunpack.c.l.b16 %v283
      %v388 = vunpack.c.l.b16 %v284
      %v389 = vunpack.c.l.b16 %v285
      %v390 = vunpack.c.l.b16 %v286
      %v391 = vunpack.c.l.b16 %v287
      %v392 = vunpack.c.l.b16 %v288
      %v393 = vunpack.c.l.b16 %v289
      %v394 = vunpack.c.l.b16 %v290
      %v395 = vunpack.c.l.b16 %v291
      %v396 = vunpack.c.l.b16 %v292
      %v397 = vunpack.c.l.b16 %v293
      %v398 = vunpack.c.l.b16 %v294
      %v399 = vunpack.c.l.b16 %v295
      %v400 = vunpack.c.l.b16 %v296
      %v401 = vunpack.c.l.b16 %v297
      %v402 = vunpack.c.l.b16 %v298
      %v403 = vunpack.c.l.b16 %v299
      %v404 = vunpack.c.l.b16 %v300
      %v405 = vunpack.c.l.b16 %v301
      %v406 = vpack.c.b16 %v359, %v358
      %v407 = vpack.c.b16 %v361, %v360
      %v408 = vpack.c.b16 %v363, %v362
      %v409 = vpack.c.b16 %v365, %v364
      %v410 = vpack.c.b16 %v367, %v366
      %v411 = vpack.c.b16 %v369, %v368
      %v412 = vpack.c.b16 %v371, %v370
      %v413 = vpack.c.b16 %v373, %v372
      %v414 = vpack.c.b16 %v375, %v374
      %v415 = vpack.c.b16 %v377, %v376
      %v416 = vpack.c.b16 %v379, %v378
      %v417 = vpack.c.b16 %v381, %v380
      %v418 = vpack.c.b16 %v383, %v382
      %v419 = vpack.c.b16 %v385, %v384
      %v420 = vpack.c.b16 %v387, %v386
      %v421 = vpack.c.b16 %v389, %v388
      %v422 = vpack.c.b16 %v391, %v390
      %v423 = vpack.c.b16 %v393, %v392
      %v424 = vpack.c.b16 %v395, %v394
      %v425 = vpack.c.b16 %v397, %v396
      %v426 = vpack.c.b16 %v399, %v398
      %v427 = vpack.c.b16 %v401, %v400
      %v428 = vpack.c.b16 %v403, %v402
      %v429 = vpack.c.b16 %v405, %v404
      %v434 = vunpack.c.l.b16 %v302
      %v435 = vunpack.c.l.b16 %v303
      %v436 = vunpack.c.l.b16 %v304
      %v437 = vunpack.c.l.b16 %v305
      %v438 = vpack.c.b16 %v435, %v434
      %v439 = vpack.c.b16 %v437, %v436
      %vm441 = vcmask 220160
      %v443 = vsel %vm441, %v406, 0
      %v446 = vsel %vm441, %v407, 0
      %v449 = vsel %vm441, %v408, 0
      %v452 = vsel %vm441, %v409, 0
      %v455 = vsel %vm441, %v410, 0
      %v458 = vsel %vm441, %v411, 0
      %v461 = vsel %vm441, %v412, 0
      %v464 = vsel %vm441, %v413, 0
      %v467 = vsel %vm441, %v414, 0
      %v470 = vsel %vm441, %v415, 0
      %v473 = vsel %vm441, %v416, 0
      %v476 = vsel %vm441, %v417, 0
      %v479 = vsel %vm441, %v418, 0
      %v482 = vsel %vm441, %v419, 0
      %v485 = vsel %vm441, %v420, 0
      %v488 = vsel %vm441, %v421, 0
      %v491 = vsel %vm441, %v422, 0
      %v494 = vsel %vm441, %v423, 0
      %v497 = vsel %vm441, %v424, 0
      %v500 = vsel %vm441, %v425, 0
      %v503 = vsel %vm441, %v426, 0
      %v506 = vsel %vm441, %v427, 0
      %v509 = vsel %vm441, %v428, 0
      %v512 = vsel %vm441, %v429, 0
      %vm514 = vcmask 1044480
      %vm515 = vcmask 1045504
      %v516 = vsel %vm514, 4294967295, 65535
      %v517 = vsel %vm515, %v516, 0
      %v519 = vand.u32 %v439, %v517
      %521 = vmatpush.bf16.msra.mxu0 0
      %522 = vmatpush.bf16.msra.mxu0 0
      %523 = vmatpush.bf16.msra.mxu0 0
      %524 = vmatpush.bf16.msra.mxu0 0
      %525 = vmatpush.bf16.msra.mxu0 0
      %526 = vmatpush.bf16.msra.mxu0 0
      %527 = vmatpush.bf16.msra.mxu0 %v519
      %528 = vmatpush.bf16.msra.mxu0 %v438
      %529 = vmatmul.bf16.gmra.mxu0 %v443
      %v530 = vpop.f32.mrf.mxu0
      %v531 = vadd.f32 %v308, %v530
      %v532 = vpop.f32.mrf.mxu0
      %v533 = vadd.f32 %v308, %v532
      %534 = vmatmul.bf16.gmra.mxu0 %v446
      %v535 = vpop.f32.mrf.mxu0
      %v536 = vadd.f32 %v308, %v535
      %v537 = vpop.f32.mrf.mxu0
      %v538 = vadd.f32 %v308, %v537
      %539 = vmatmul.bf16.gmra.mxu0 %v449
      %v540 = vpop.f32.mrf.mxu0
      %v541 = vadd.f32 %v308, %v540
      %v542 = vpop.f32.mrf.mxu0
      %v543 = vadd.f32 %v308, %v542
      %544 = vmatmul.bf16.gmra.mxu0 %v452
      %v545 = vpop.f32.mrf.mxu0
      %v546 = vadd.f32 %v308, %v545
      %v547 = vpop.f32.mrf.mxu0
      %v548 = vadd.f32 %v308, %v547
      %549 = vmatmul.bf16.gmra.mxu0 %v455
      %v550 = vpop.f32.mrf.mxu0
      %v551 = vadd.f32 %v308, %v550
      %v552 = vpop.f32.mrf.mxu0
      %v553 = vadd.f32 %v308, %v552
      %554 = vmatmul.bf16.gmra.mxu0 %v458
      %v555 = vpop.f32.mrf.mxu0
      %v556 = vadd.f32 %v308, %v555
      %v557 = vpop.f32.mrf.mxu0
      %v558 = vadd.f32 %v308, %v557
      %559 = vmatmul.bf16.gmra.mxu0 %v461
      %v560 = vpop.f32.mrf.mxu0
      %v561 = vadd.f32 %v308, %v560
      %v562 = vpop.f32.mrf.mxu0
      %v563 = vadd.f32 %v308, %v562
      %564 = vmatmul.bf16.gmra.mxu0 %v464
      %v565 = vpop.f32.mrf.mxu0
      %v566 = vadd.f32 %v308, %v565
      %v567 = vpop.f32.mrf.mxu0
      %v568 = vadd.f32 %v308, %v567
      %569 = vmatmul.bf16.gmra.mxu0 %v467
      %v570 = vpop.f32.mrf.mxu0
      %v571 = vadd.f32 %v308, %v570
      %v572 = vpop.f32.mrf.mxu0
      %v573 = vadd.f32 %v308, %v572
      %574 = vmatmul.bf16.gmra.mxu0 %v470
      %v575 = vpop.f32.mrf.mxu0
      %v576 = vadd.f32 %v308, %v575
      %v577 = vpop.f32.mrf.mxu0
      %v578 = vadd.f32 %v308, %v577
      %579 = vmatmul.bf16.gmra.mxu0 %v473
      %v580 = vpop.f32.mrf.mxu0
      %v581 = vadd.f32 %v308, %v580
      %v582 = vpop.f32.mrf.mxu0
      %v583 = vadd.f32 %v308, %v582
      %584 = vmatmul.bf16.gmra.mxu0 %v476
      %v585 = vpop.f32.mrf.mxu0
      %v586 = vadd.f32 %v308, %v585
      %v587 = vpop.f32.mrf.mxu0
      %v588 = vadd.f32 %v308, %v587
      %589 = vmatmul.bf16.gmra.mxu0 %v479
      %v590 = vpop.f32.mrf.mxu0
      %v591 = vadd.f32 %v308, %v590
      %v592 = vpop.f32.mrf.mxu0
      %v593 = vadd.f32 %v308, %v592
      %594 = vmatmul.bf16.gmra.mxu0 %v482
      %v595 = vpop.f32.mrf.mxu0
      %v596 = vadd.f32 %v308, %v595
      %v597 = vpop.f32.mrf.mxu0
      %v598 = vadd.f32 %v308, %v597
      %599 = vmatmul.bf16.gmra.mxu0 %v485
      %v600 = vpop.f32.mrf.mxu0
      %v601 = vadd.f32 %v308, %v600
      %v602 = vpop.f32.mrf.mxu0
      %v603 = vadd.f32 %v308, %v602
      %604 = vmatmul.bf16.gmra.mxu0 %v488
      %v605 = vpop.f32.mrf.mxu0
      %v606 = vadd.f32 %v308, %v605
      %v607 = vpop.f32.mrf.mxu0
      %v608 = vadd.f32 %v308, %v607
      %609 = vmatmul.bf16.gmra.mxu0 %v491
      %v610 = vpop.f32.mrf.mxu0
      %v611 = vadd.f32 %v308, %v610
      %v612 = vpop.f32.mrf.mxu0
      %v613 = vadd.f32 %v308, %v612
      %614 = vmatmul.bf16.gmra.mxu0 %v494
      %v615 = vpop.f32.mrf.mxu0
      %v616 = vadd.f32 %v308, %v615
      %v617 = vpop.f32.mrf.mxu0
      %v618 = vadd.f32 %v308, %v617
      %619 = vmatmul.bf16.gmra.mxu0 %v497
      %v620 = vpop.f32.mrf.mxu0
      %v621 = vadd.f32 %v308, %v620
      %v622 = vpop.f32.mrf.mxu0
      %v623 = vadd.f32 %v308, %v622
      %624 = vmatmul.bf16.gmra.mxu0 %v500
      %v625 = vpop.f32.mrf.mxu0
      %v626 = vadd.f32 %v308, %v625
      %v627 = vpop.f32.mrf.mxu0
      %v628 = vadd.f32 %v308, %v627
      %629 = vmatmul.bf16.gmra.mxu0 %v503
      %v630 = vpop.f32.mrf.mxu0
      %v631 = vadd.f32 %v308, %v630
      %v632 = vpop.f32.mrf.mxu0
      %v633 = vadd.f32 %v308, %v632
      %634 = vmatmul.bf16.gmra.mxu0 %v506
      %v635 = vpop.f32.mrf.mxu0
      %v636 = vadd.f32 %v308, %v635
      %v637 = vpop.f32.mrf.mxu0
      %v638 = vadd.f32 %v308, %v637
      %639 = vmatmul.bf16.gmra.mxu0 %v509
      %v640 = vpop.f32.mrf.mxu0
      %v641 = vadd.f32 %v308, %v640
      %v642 = vpop.f32.mrf.mxu0
      %v643 = vadd.f32 %v308, %v642
      %644 = vmatmul.bf16.gmra.mxu0 %v512
      %v645 = vpop.f32.mrf.mxu0
      %v646 = vadd.f32 %v308, %v645
      %v647 = vpop.f32.mrf.mxu0
      %v648 = vadd.f32 %v308, %v647
      %649 = vdwg.mxu0
      %v650 = vmax.f32 %v531, 0.0
      %v651 = vmax.f32 %v533, 0.0
      %v652 = vmax.f32 %v536, 0.0
      %v653 = vmax.f32 %v538, 0.0
      %v654 = vmax.f32 %v541, 0.0
      %v655 = vmax.f32 %v543, 0.0
      %v656 = vmax.f32 %v546, 0.0
      %v657 = vmax.f32 %v548, 0.0
      %v658 = vmax.f32 %v551, 0.0
      %v659 = vmax.f32 %v553, 0.0
      %v660 = vmax.f32 %v556, 0.0
      %v661 = vmax.f32 %v558, 0.0
      %v662 = vmax.f32 %v561, 0.0
      %v663 = vmax.f32 %v563, 0.0
      %v664 = vmax.f32 %v566, 0.0
      %v665 = vmax.f32 %v568, 0.0
      %v666 = vmax.f32 %v571, 0.0
      %v667 = vmax.f32 %v573, 0.0
      %v668 = vmax.f32 %v576, 0.0
      %v669 = vmax.f32 %v578, 0.0
      %v670 = vmax.f32 %v581, 0.0
      %v671 = vmax.f32 %v583, 0.0
      %v672 = vmax.f32 %v586, 0.0
      %v673 = vmax.f32 %v588, 0.0
      %v674 = vmax.f32 %v591, 0.0
      %v675 = vmax.f32 %v593, 0.0
      %v676 = vmax.f32 %v596, 0.0
      %v677 = vmax.f32 %v598, 0.0
      %v678 = vmax.f32 %v601, 0.0
      %v679 = vmax.f32 %v603, 0.0
      %v680 = vmax.f32 %v606, 0.0
      %v681 = vmax.f32 %v608, 0.0
      %v682 = vmax.f32 %v611, 0.0
      %v683 = vmax.f32 %v613, 0.0
      %v684 = vmax.f32 %v616, 0.0
      %v685 = vmax.f32 %v618, 0.0
      %v686 = vmax.f32 %v621, 0.0
      %v687 = vmax.f32 %v623, 0.0
      %v688 = vmax.f32 %v626, 0.0
      %v689 = vmax.f32 %v628, 0.0
      %v690 = vmax.f32 %v631, 0.0
      %v691 = vmax.f32 %v633, 0.0
      %v692 = vmax.f32 %v636, 0.0
      %v693 = vmax.f32 %v638, 0.0
      %v694 = vmax.f32 %v641, 0.0
      %v695 = vmax.f32 %v643, 0.0
      %v696 = vmax.f32 %v646, 0.0
      %v697 = vmax.f32 %v648, 0.0
      %v698 = vpack.c.bf16 %v650, %v650
      %v699 = vpack.c.bf16 %v651, %v651
      %v700 = vpack.c.bf16 %v652, %v652
      %v701 = vpack.c.bf16 %v653, %v653
      %v702 = vpack.c.bf16 %v654, %v654
      %v703 = vpack.c.bf16 %v655, %v655
      %v704 = vpack.c.bf16 %v656, %v656
      %v705 = vpack.c.bf16 %v657, %v657
      %v706 = vpack.c.bf16 %v658, %v658
      %v707 = vpack.c.bf16 %v659, %v659
      %v708 = vpack.c.bf16 %v660, %v660
      %v709 = vpack.c.bf16 %v661, %v661
      %v710 = vpack.c.bf16 %v662, %v662
      %v711 = vpack.c.bf16 %v663, %v663
      %v712 = vpack.c.bf16 %v664, %v664
      %v713 = vpack.c.bf16 %v665, %v665
      %v714 = vpack.c.bf16 %v666, %v666
      %v715 = vpack.c.bf16 %v667, %v667
      %v716 = vpack.c.bf16 %v668, %v668
      %v717 = vpack.c.bf16 %v669, %v669
      %v718 = vpack.c.bf16 %v670, %v670
      %v719 = vpack.c.bf16 %v671, %v671
      %v720 = vpack.c.bf16 %v672, %v672
      %v721 = vpack.c.bf16 %v673, %v673
      %v722 = vpack.c.bf16 %v674, %v674
      %v723 = vpack.c.bf16 %v675, %v675
      %v724 = vpack.c.bf16 %v676, %v676
      %v725 = vpack.c.bf16 %v677, %v677
      %v726 = vpack.c.bf16 %v678, %v678
      %v727 = vpack.c.bf16 %v679, %v679
      %v728 = vpack.c.bf16 %v680, %v680
      %v729 = vpack.c.bf16 %v681, %v681
      %v730 = vpack.c.bf16 %v682, %v682
      %v731 = vpack.c.bf16 %v683, %v683
      %v732 = vpack.c.bf16 %v684, %v684
      %v733 = vpack.c.bf16 %v685, %v685
      %v734 = vpack.c.bf16 %v686, %v686
      %v735 = vpack.c.bf16 %v687, %v687
      %v736 = vpack.c.bf16 %v688, %v688
      %v737 = vpack.c.bf16 %v689, %v689
      %v738 = vpack.c.bf16 %v690, %v690
      %v739 = vpack.c.bf16 %v691, %v691
      %v740 = vpack.c.bf16 %v692, %v692
      %v741 = vpack.c.bf16 %v693, %v693
      %v742 = vpack.c.bf16 %v694, %v694
      %v743 = vpack.c.bf16 %v695, %v695
      %v744 = vpack.c.bf16 %v696, %v696
      %v745 = vpack.c.bf16 %v697, %v697
      %vm746 = vcmask 519168
      %747 = vst.msk [vmem:[%s252] sm:$0xf] %vm746, %v698
      %748 = vst.msk [vmem:[%s252 + $0x4] sm:$0xf] %vm746, %v699
      %749 = vst.msk [vmem:[%s252 + $0x8] sm:$0xf] %vm746, %v700
      %750 = vst.msk [vmem:[%s252 + $0xc] sm:$0xf] %vm746, %v701
      %751 = vst.msk [vmem:[%s252 + $0x10] sm:$0xf] %vm746, %v702
      %752 = vst.msk [vmem:[%s252 + $0x14] sm:$0xf] %vm746, %v703
      %753 = vst.msk [vmem:[%s252 + $0x18] sm:$0xf] %vm746, %v704
      %754 = vst.msk [vmem:[%s252 + $0x1c] sm:$0xf] %vm746, %v705
      %755 = vst.msk [vmem:[%s252 + $0x20] sm:$0xf] %vm746, %v706
      %756 = vst.msk [vmem:[%s252 + $0x24] sm:$0xf] %vm746, %v707
      %757 = vst.msk [vmem:[%s252 + $0x28] sm:$0xf] %vm746, %v708
      %758 = vst.msk [vmem:[%s252 + $0x2c] sm:$0xf] %vm746, %v709
      %759 = vst.msk [vmem:[%s252 + $0x30] sm:$0xf] %vm746, %v710
      %760 = vst.msk [vmem:[%s252 + $0x34] sm:$0xf] %vm746, %v711
      %761 = vst.msk [vmem:[%s252 + $0x38] sm:$0xf] %vm746, %v712
      %762 = vst.msk [vmem:[%s252 + $0x3c] sm:$0xf] %vm746, %v713
      %763 = vst.msk [vmem:[%s252 + $0x40] sm:$0xf] %vm746, %v714
      %764 = vst.msk [vmem:[%s252 + $0x44] sm:$0xf] %vm746, %v715
      %765 = vst.msk [vmem:[%s252 + $0x48] sm:$0xf] %vm746, %v716
      %766 = vst.msk [vmem:[%s252 + $0x4c] sm:$0xf] %vm746, %v717
      %767 = vst.msk [vmem:[%s252 + $0x50] sm:$0xf] %vm746, %v718
      %768 = vst.msk [vmem:[%s252 + $0x54] sm:$0xf] %vm746, %v719
      %769 = vst.msk [vmem:[%s252 + $0x58] sm:$0xf] %vm746, %v720
      %770 = vst.msk [vmem:[%s252 + $0x5c] sm:$0xf] %vm746, %v721
      %771 = vst.msk [vmem:[%s252 + $0x60] sm:$0xf] %vm746, %v722
      %772 = vst.msk [vmem:[%s252 + $0x64] sm:$0xf] %vm746, %v723
      %773 = vst.msk [vmem:[%s252 + $0x68] sm:$0xf] %vm746, %v724
      %774 = vst.msk [vmem:[%s252 + $0x6c] sm:$0xf] %vm746, %v725
      %775 = vst.msk [vmem:[%s252 + $0x70] sm:$0xf] %vm746, %v726
      %776 = vst.msk [vmem:[%s252 + $0x74] sm:$0xf] %vm746, %v727
      %777 = vst.msk [vmem:[%s252 + $0x78] sm:$0xf] %vm746, %v728
      %778 = vst.msk [vmem:[%s252 + $0x7c] sm:$0xf] %vm746, %v729
      %779 = vst.msk [vmem:[%s252 + $0x80] sm:$0xf] %vm746, %v730
      %780 = vst.msk [vmem:[%s252 + $0x84] sm:$0xf] %vm746, %v731
      %781 = vst.msk [vmem:[%s252 + $0x88] sm:$0xf] %vm746, %v732
      %782 = vst.msk [vmem:[%s252 + $0x8c] sm:$0xf] %vm746, %v733
      %783 = vst.msk [vmem:[%s252 + $0x90] sm:$0xf] %vm746, %v734
      %784 = vst.msk [vmem:[%s252 + $0x94] sm:$0xf] %vm746, %v735
      %785 = vst.msk [vmem:[%s252 + $0x98] sm:$0xf] %vm746, %v736
      %786 = vst.msk [vmem:[%s252 + $0x9c] sm:$0xf] %vm746, %v737
      %787 = vst.msk [vmem:[%s252 + $0xa0] sm:$0xf] %vm746, %v738
      %788 = vst.msk [vmem:[%s252 + $0xa4] sm:$0xf] %vm746, %v739
      %789 = vst.msk [vmem:[%s252 + $0xa8] sm:$0xf] %vm746, %v740
      %790 = vst.msk [vmem:[%s252 + $0xac] sm:$0xf] %vm746, %v741
      %791 = vst.msk [vmem:[%s252 + $0xb0] sm:$0xf] %vm746, %v742
      %792 = vst.msk [vmem:[%s252 + $0xb4] sm:$0xf] %vm746, %v743
      %793 = vst.msk [vmem:[%s252 + $0xb8] sm:$0xf] %vm746, %v744
      %794 = vst.msk [vmem:[%s252 + $0xbc] sm:$0xf] %vm746, %v745
      %p795 = scmp.lt.s32.totalorder %s19, 1
      %s796 = scalar_select %p795, %s19, 1
      %p797 = scmp.lt.s32.totalorder %s20, 0
      %s798 = scalar_select %p797, %s20, 0
      %p799 = scmp.lt.s32.totalorder %s21, 0
      %s800 = scalar_select %p799, %s21, 0
      %s801 = smul.addr %s798, 48
      %s802 = sadd.s32 %s800, %s801
      %s803 = smul.addr %s796, 48
      %s804 = sadd.s32 %s802, %s803
      %s805 = smul.addr %s804, 4
      %s806 = scalar_lea.vmem %s3, %s805
      // Predicated region
      $region33: #{_lambda_.1} parent=31 // pred_check
        %p807 = pneg %p135
      $region34: #{_lambda_.1} parent=31 // pred_check_branch
        %809 = sbr.rel (%p807) target = $region36
      $region35: #{_lambda_.1} parent=31 // pred_region
        _
      $region36: #{_lambda_.1} parent=31 // pred_fallthru
        _
    $region32: #{_lambda_.1} parent=5 // pred_fallthru
      _
    %p810 = scmp.le.s32.totalorder 2, %s9
    // Predicated region
    $region37: #{_lambda_.1} parent=5 // pred_check
      %p811 = pneg %p810
    $region38: #{_lambda_.1} parent=5 // pred_check_branch
      %813 = sbr.rel (%p811) target = $region40
    $region39: #{_lambda_.1} parent=5 // pred_region
      %s814 = ssub.s32 %s9, 2
      // Predicated region
      $region41: #{_lambda_.1} parent=39 // pred_check
        %p815 = pneg %p141
      $region42: #{_lambda_.1} parent=39 // pred_check_branch
        %817 = sbr.rel (%p815) target = $region44
      $region43: #{_lambda_.1} parent=39 // pred_region
        %p818 = scmp.lt.s32.totalorder %s22, 1
        %s819 = scalar_select %p818, %s22, 1
        %p820 = scmp.lt.s32.totalorder %s23, 0
        %s821 = scalar_select %p820, %s23, 0
        %p822 = scmp.lt.s32.totalorder %s24, 0
        %s823 = scalar_select %p822, %s24, 0
        %s824 = smul.addr %s821, 48
        %s825 = sadd.s32 %s823, %s824
        %s826 = smul.addr %s819, 48
        %s827 = sadd.s32 %s825, %s826
        %s828 = smul.addr %s827, 4
        %s829 = scalar_lea.vmem %s3, %s828
      $region44: #{_lambda_.1} parent=39 // pred_fallthru
        _
    $region40: #{_lambda_.1} parent=5 // pred_fallthru
      _
  $region6: #{_lambda_.1} parent=0 // loop_footer
    %s13 = sadd.s32 1, %s9
  $region7: #{_lambda_.1} parent=0 // loop_footer_branch
    %8 = sbr.rel target = $region3
  $region8: #{_lambda_.1} parent=0 // loop_exit
    _

</llo_original>
